<compile_context>
chip_gen: v5e
topology: v5e:2x2
jax: 0.10.0
libtpu: 0.0.40
codegen_flags: <defaults>
</compile_context>

<pallas_src>
import jax
import jax.numpy as jnp
from jax.experimental import pallas as pl
from jax.experimental.pallas import tpu as pltpu


def _round_up(n, m):
    return ((n + m - 1) // m) * m


def cond_encoder_kernel(x_ref,
                        w1_ref, b1_ref,
                        w2_ref, b2_ref,
                        wh_ref, bh_ref,
                        out_ref):
    """Fused hot path: 2x (Linear + ReLU) + fused mu|logvar head matmul."""
    x = x_ref[...]                                             # f32 (tile, x_dim)

    # encoder_layer_0: Linear(x_dim, h1) -> ReLU  (CondBatchNorm1d: see TODO)
    h = jnp.dot(x.astype(jnp.bfloat16), w1_ref[...],
                preferred_element_type=jnp.float32) + b1_ref[...]
    h = jnp.maximum(h, 0.0)

    # encoder_layer_1: Linear(h1, h2) -> ReLU
    h = jnp.dot(h.astype(jnp.bfloat16), w2_ref[...],
                preferred_element_type=jnp.float32) + b2_ref[...]
    h = jnp.maximum(h, 0.0)

    # fused heads: [mu | logvar] in one matmul, one wide store
    out_ref[...] = jnp.dot(h.astype(jnp.bfloat16), wh_ref[...],
                           preferred_element_type=jnp.float32) + bh_ref[...]


def prepare_params(params):
    """One-time parameter preparation (hoisted out of the per-call hot path):
    bf16 weights (MXU-native), f32 biases, mu|logvar head fused."""
    (w1, b1), (w2, b2), (wmu, bmu), (wlv, blv) = params
    return {
        "w1": jnp.asarray(w1, jnp.bfloat16),
        "b1": jnp.asarray(b1, jnp.float32),
        "w2": jnp.asarray(w2, jnp.bfloat16),
        "b2": jnp.asarray(b2, jnp.float32),
        "w_head": jnp.concatenate([wmu, wlv], axis=1).astype(jnp.bfloat16),
        "b_head": jnp.concatenate([bmu, blv], axis=1).astype(jnp.float32),
        "z_dim": int(wmu.shape[1]),
    }


def cond_encoder_forward(x, x_cond, prepared, *, batch_tile=2048):
    """Mimics CondEncoder.forward((x, x_cond)) -> (mu, logvar).

    x:      (B, x_dim) float32
    x_cond: (B, cond_dim) float32  (unused: carried through TupleWrapper and
            only consumed by CondBatchNorm1d, which is not defined in source)
    prepared: output of prepare_params(params)
    """
    del x_cond  # see TODO(synk) at top of file

    B, x_dim = x.shape
    z_dim = prepared["z_dim"]
    w1, b1 = prepared["w1"], prepared["b1"]
    w2, b2 = prepared["w2"], prepared["b2"]
    w_head, b_head = prepared["w_head"], prepared["b_head"]

    # Batch tiling: fill the MXU M-dimension.  No wrapper-side padding of x:
    # Pallas masks the ragged last block itself.
    tile = min(batch_tile, _round_up(B, 8))
    # v7x megacore: make sure the parallel axis has >= 2 steps when possible.
    if pl.cdiv(B, tile) == 1 and tile > 8:
        tile = max(8, _round_up(pl.cdiv(B, 2), 8))
    grid = (pl.cdiv(B, tile),)

    def full_spec(arr):
        return pl.BlockSpec(arr.shape, lambda i: (0, 0))

    in_specs = [
        pl.BlockSpec((tile, x_dim), lambda i: (i, 0)),    # x (batch-tiled)
        full_spec(w1), full_spec(b1),
        full_spec(w2), full_spec(b2),
        full_spec(w_head), full_spec(b_head),
    ]
    out_specs = pl.BlockSpec((tile, 2 * z_dim), lambda i: (i, 0))

    cp_kwargs = dict(dimension_semantics=("parallel",))
    if tile >= 4096:
        # (tile, 16) f32 blocks lane-pad to (tile, 128) in VMEM and are
        # double-buffered; raise the scoped limit (with headroom) only then.
        cp_kwargs["vmem_limit_bytes"] = 48 << 20

    out = pl.pallas_call(
        cond_encoder_kernel,
        out_shape=jax.ShapeDtypeStruct((B, 2 * z_dim), jnp.float32),
        grid=grid,
        in_specs=in_specs,
        out_specs=out_specs,
        compiler_params=pltpu.CompilerParams(**cp_kwargs),
    )(x, w1, b1, w2, b2, w_head, b_head)

    mu = out[:, :z_dim]
    logvar = out[:, z_dim:]
    return mu, logvar


def make_params(key, x_dim, hidden_features_list, z_dim):
    """Deterministic synthetic parameters (weights stored (in, out), f32)."""
    dims = [x_dim] + list(hidden_features_list)
    keys = jax.random.split(key, 2 * len(hidden_features_list) + 4)
    params = []
    ki = 0
    for d_in, d_out in zip(dims[:-1], dims[1:]):
        w = jax.random.normal(keys[ki], (d_in, d_out), jnp.float32) * 0.1
        b = jax.random.normal(keys[ki + 1], (1, d_out), jnp.float32) * 0.1
        params.append((w, b))
        ki += 2
    d_last = dims[-1]
    wmu = jax.random.normal(keys[ki], (d_last, z_dim), jnp.float32) * 0.1
    bmu = jax.random.normal(keys[ki + 1], (1, z_dim), jnp.float32) * 0.1
    wlv = jax.random.normal(keys[ki + 2], (d_last, z_dim), jnp.float32) * 0.1
    blv = jax.random.normal(keys[ki + 3], (1, z_dim), jnp.float32) * 0.1
    params.append((wmu, bmu))
    params.append((wlv, blv))
    return params


def reference_forward_bf16(x, params):
    """Pure-JAX reference using the SAME bf16 weight / activation quantization
    and f32 accumulation as the kernel."""
    (w1, b1), (w2, b2), (wmu, bmu), (wlv, blv) = params
    w1b, w2b = w1.astype(jnp.bfloat16), w2.astype(jnp.bfloat16)
    whb = jnp.concatenate([wmu, wlv], axis=1).astype(jnp.bfloat16)
    bh = jnp.concatenate([bmu, blv], axis=1)
    z_dim = wmu.shape[1]

    h = jnp.maximum(jnp.dot(x.astype(jnp.bfloat16), w1b,
                            preferred_element_type=jnp.float32) + b1, 0.0)
    h = jnp.maximum(jnp.dot(h.astype(jnp.bfloat16), w2b,
                            preferred_element_type=jnp.float32) + b2, 0.0)
    out = jnp.dot(h.astype(jnp.bfloat16), whb,
                  preferred_element_type=jnp.float32) + bh
    return out[:, :z_dim], out[:, z_dim:]


def reference_forward_f32(x, params):
    """Full-precision (f32) reference matching PyTorch Linear semantics."""
    (w1, b1), (w2, b2), (wmu, bmu), (wlv, blv) = params
    h = jnp.maximum(x @ w1 + b1, 0.0)
    h = jnp.maximum(h @ w2 + b2, 0.0)
    return h @ wmu + bmu, h @ wlv + blv


if __name__ == "__main__":
    # CondEncoder(x_dim=16, z_dim=8, cond_dim=4, hidden_features_list=[32, 32])
    B, x_dim, cond_dim, z_dim = 16, 16, 4, 8
    hidden_features_list = [32, 32]

    key = jax.random.PRNGKey(0)
    k_x, k_c, k_p = jax.random.split(key, 3)
    x = jax.random.normal(k_x, (B, x_dim), jnp.float32)
    x_cond = jax.random.normal(k_c, (B, cond_dim), jnp.float32)
    params = make_params(k_p, x_dim, hidden_features_list, z_dim)
    prepared = prepare_params(params)

    mu, logvar = cond_encoder_forward(x, x_cond, prepared)
    jax.block_until_ready((mu, logvar))

    assert mu.shape == (B, z_dim) and logvar.shape == (B, z_dim)

    # bf16-quantization-matched check (tight)
    mu_q, lv_q = reference_forward_bf16(x, params)
    assert jnp.allclose(mu, mu_q, atol=1e-2, rtol=1e-2), "mu mismatch vs bf16 reference"
    assert jnp.allclose(logvar, lv_q, atol=1e-2, rtol=1e-2), "logvar mismatch vs bf16 reference"

    # full f32 (PyTorch-semantics) check (loose, accounts for bf16 MXU inputs)
    mu_f, lv_f = reference_forward_f32(x, params)
    assert jnp.allclose(mu, mu_f, atol=5e-2, rtol=5e-2), "mu mismatch vs f32 reference"
    assert jnp.allclose(logvar, lv_f, atol=5e-2, rtol=5e-2), "logvar mismatch vs f32 reference"

    print("KERNEL_OK")
</pallas_src>

<mosaic_0001>
module attributes {stable_mosaic.version = 11 : i64} {
  func.func @cond_encoder_kernel(%arg0: i32, %arg1: memref<8x16xf32, #tpu.memory_space<vmem>>, %arg2: memref<16x32xbf16, #tpu.memory_space<vmem>>, %arg3: memref<1x32xf32, #tpu.memory_space<vmem>>, %arg4: memref<32x32xbf16, #tpu.memory_space<vmem>>, %arg5: memref<1x32xf32, #tpu.memory_space<vmem>>, %arg6: memref<32x16xbf16, #tpu.memory_space<vmem>>, %arg7: memref<1x16xf32, #tpu.memory_space<vmem>>, %arg8: memref<8x16xf32, #tpu.memory_space<vmem>>) attributes {dimension_semantics = [#tpu.dimension_semantics<parallel>], iteration_bounds = array<i64: 2>, scalar_prefetch = 0 : i64, scratch_operands = 0 : i64, tpu.core_type = #tpu.core_type<tc>, window_params = [{transform_indices = @transform_0, window_bounds = array<i64: 8, 16>}, {pipeline_mode = #tpu.pipeline_mode<synchronous>, transform_indices = @transform_1, window_bounds = array<i64: 16, 32>}, {pipeline_mode = #tpu.pipeline_mode<synchronous>, transform_indices = @transform_2, window_bounds = array<i64: 1, 32>}, {pipeline_mode = #tpu.pipeline_mode<synchronous>, transform_indices = @transform_3, window_bounds = array<i64: 32, 32>}, {pipeline_mode = #tpu.pipeline_mode<synchronous>, transform_indices = @transform_4, window_bounds = array<i64: 1, 32>}, {pipeline_mode = #tpu.pipeline_mode<synchronous>, transform_indices = @transform_5, window_bounds = array<i64: 32, 16>}, {pipeline_mode = #tpu.pipeline_mode<synchronous>, transform_indices = @transform_6, window_bounds = array<i64: 1, 16>}, {transform_indices = @transform_7, window_bounds = array<i64: 8, 16>}]} {
    %c0 = arith.constant 0 : index
    %c0_0 = arith.constant 0 : index
    %0 = vector.load %arg1[%c0, %c0_0] : memref<8x16xf32, #tpu.memory_space<vmem>>, vector<8x16xf32>
    %1 = arith.truncf %0 : vector<8x16xf32> to vector<8x16xbf16>
    %c0_1 = arith.constant 0 : index
    %c0_2 = arith.constant 0 : index
    %2 = vector.load %arg2[%c0_1, %c0_2] : memref<16x32xbf16, #tpu.memory_space<vmem>>, vector<16x32xbf16>
    %cst = arith.constant dense<0.000000e+00> : vector<8x32xf32>
    %3 = tpu.matmul %1, %2, %cst {dimension_numbers = #tpu.dot_dimension_numbers<[1], [0], [0], [1], [0, 0, 1, 1], [], []>} : vector<8x16xbf16>, vector<16x32xbf16>, vector<8x32xf32> -> vector<8x32xf32>
    %c0_3 = arith.constant 0 : index
    %c0_4 = arith.constant 0 : index
    %4 = vector.load %arg3[%c0_3, %c0_4] : memref<1x32xf32, #tpu.memory_space<vmem>>, vector<1x32xf32>
    %5 = vector.broadcast %4 : vector<1x32xf32> to vector<8x32xf32>
    %6 = arith.addf %3, %5 : vector<8x32xf32>
    %cst_5 = arith.constant 0.000000e+00 : f32
    %7 = vector.broadcast %cst_5 : f32 to vector<8x32xf32>
    %8 = arith.maximumf %6, %7 : vector<8x32xf32>
    %9 = arith.truncf %8 : vector<8x32xf32> to vector<8x32xbf16>
    %c0_6 = arith.constant 0 : index
    %c0_7 = arith.constant 0 : index
    %10 = vector.load %arg4[%c0_6, %c0_7] : memref<32x32xbf16, #tpu.memory_space<vmem>>, vector<32x32xbf16>
    %cst_8 = arith.constant dense<0.000000e+00> : vector<8x32xf32>
    %11 = tpu.matmul %9, %10, %cst_8 {dimension_numbers = #tpu.dot_dimension_numbers<[1], [0], [0], [1], [0, 0, 1, 1], [], []>} : vector<8x32xbf16>, vector<32x32xbf16>, vector<8x32xf32> -> vector<8x32xf32>
    %c0_9 = arith.constant 0 : index
    %c0_10 = arith.constant 0 : index
    %12 = vector.load %arg5[%c0_9, %c0_10] : memref<1x32xf32, #tpu.memory_space<vmem>>, vector<1x32xf32>
    %13 = vector.broadcast %12 : vector<1x32xf32> to vector<8x32xf32>
    %14 = arith.addf %11, %13 : vector<8x32xf32>
    %cst_11 = arith.constant 0.000000e+00 : f32
    %15 = vector.broadcast %cst_11 : f32 to vector<8x32xf32>
    %16 = arith.maximumf %14, %15 : vector<8x32xf32>
    %17 = arith.truncf %16 : vector<8x32xf32> to vector<8x32xbf16>
    %c0_12 = arith.constant 0 : index
    %c0_13 = arith.constant 0 : index
    %18 = vector.load %arg6[%c0_12, %c0_13] : memref<32x16xbf16, #tpu.memory_space<vmem>>, vector<32x16xbf16>
    %cst_14 = arith.constant dense<0.000000e+00> : vector<8x16xf32>
    %19 = tpu.matmul %17, %18, %cst_14 {dimension_numbers = #tpu.dot_dimension_numbers<[1], [0], [0], [1], [0, 0, 1, 1], [], []>} : vector<8x32xbf16>, vector<32x16xbf16>, vector<8x16xf32> -> vector<8x16xf32>
    %c0_15 = arith.constant 0 : index
    %c0_16 = arith.constant 0 : index
    %20 = vector.load %arg7[%c0_15, %c0_16] : memref<1x16xf32, #tpu.memory_space<vmem>>, vector<1x16xf32>
    %21 = vector.broadcast %20 : vector<1x16xf32> to vector<8x16xf32>
    %22 = arith.addf %19, %21 : vector<8x16xf32>
    %c0_17 = arith.constant 0 : index
    %c0_18 = arith.constant 0 : index
    %23 = vector.load %arg8[%c0_17, %c0_18] : memref<8x16xf32, #tpu.memory_space<vmem>>, vector<8x16xf32>
    tpu.vector_store %arg8[%c0_17, %c0_18], %22 {strides = array<i32>} : memref<8x16xf32, #tpu.memory_space<vmem>>, vector<8x16xf32>,
    return
  }
  func.func @transform_0(%arg0: i32) -> (i32, i32) {
    %c0_i32 = arith.constant 0 : i32
    %c0_i32_0 = arith.constant 0 : i32
    return %arg0, %c0_i32 : i32, i32
  }
  func.func @transform_1(%arg0: i32) -> (i32, i32) {
    %c0_i32 = arith.constant 0 : i32
    %c0_i32_0 = arith.constant 0 : i32
    %c0_i32_1 = arith.constant 0 : i32
    return %c0_i32, %c0_i32_0 : i32, i32
  }
  func.func @transform_2(%arg0: i32) -> (i32, i32) {
    %c0_i32 = arith.constant 0 : i32
    %c0_i32_0 = arith.constant 0 : i32
    %c0_i32_1 = arith.constant 0 : i32
    return %c0_i32, %c0_i32_0 : i32, i32
  }
  func.func @transform_3(%arg0: i32) -> (i32, i32) {
    %c0_i32 = arith.constant 0 : i32
    %c0_i32_0 = arith.constant 0 : i32
    %c0_i32_1 = arith.constant 0 : i32
    return %c0_i32, %c0_i32_0 : i32, i32
  }
  func.func @transform_4(%arg0: i32) -> (i32, i32) {
    %c0_i32 = arith.constant 0 : i32
    %c0_i32_0 = arith.constant 0 : i32
    %c0_i32_1 = arith.constant 0 : i32
    return %c0_i32, %c0_i32_0 : i32, i32
  }
  func.func @transform_5(%arg0: i32) -> (i32, i32) {
    %c0_i32 = arith.constant 0 : i32
    %c0_i32_0 = arith.constant 0 : i32
    %c0_i32_1 = arith.constant 0 : i32
    return %c0_i32, %c0_i32_0 : i32, i32
  }
  func.func @transform_6(%arg0: i32) -> (i32, i32) {
    %c0_i32 = arith.constant 0 : i32
    %c0_i32_0 = arith.constant 0 : i32
    %c0_i32_1 = arith.constant 0 : i32
    return %c0_i32, %c0_i32_0 : i32, i32
  }
  func.func @transform_7(%arg0: i32) -> (i32, i32) {
    %c0_i32 = arith.constant 0 : i32
    %c0_i32_0 = arith.constant 0 : i32
    return %arg0, %c0_i32 : i32, i32
  }
}

</mosaic_0001>

<llo_original>
// kernel: tpu_custom_call.1
$region0: #{tpu_custom_call.1}
  #allocation0 [shape = 'u32[]', space=smem, size = 0x4, offset = 0x4, fixed_abs, tag = 'smem constant byte address 0x4 - core index']
  #allocation1 [shape = 'u32[72,128]{1,0:T(1,128)}', space=vmem, size = 0x9000, scoped, tag = 'internal scratch']
  %s0 = inlined_call_operand.vmem [shape: f32[16,16], index: 0, kind: input, shape index: {}]
  %s1 = inlined_call_operand.vmem [shape: bf16[16,32], index: 1, kind: input, shape index: {}]
  %s2 = inlined_call_operand.vmem [shape: f32[1,32], index: 2, kind: input, shape index: {}]
  %s3 = inlined_call_operand.hbm [shape: bf16[32,32], index: 3, kind: input, shape index: {}]
  %s4 = inlined_call_operand.vmem [shape: f32[1,32], index: 4, kind: input, shape index: {}]
  %s5 = inlined_call_operand.vmem [shape: bf16[32,16], index: 5, kind: input, shape index: {}]
  %s6 = inlined_call_operand.vmem [shape: f32[1,16], index: 6, kind: input, shape index: {}]
  %s7 = inlined_call_operand.hbm [shape: f32[16,16], index: 7, kind: output, shape index: {}]
  %s8 = sld [smem:[#allocation0]]
  $region65: #{tpu_custom_call.1} parent=0
    _
  %s10 = ssub.s32 1, %s8
  %s11 = scalar_select 0, %s10, %s8
  $region1: #{tpu_custom_call.1} parent=0
    #allocation2 [shape = 'u8[8192]{0}', space=vmem, size = 0x2000, scoped, tag = 'input window, operand 3, single buffered']
    #allocation3 [shape = 's32[2]{0}', space=sflag, size = 0x8, scoped, tag = 'scoped memory for tpu_custom_call.1']
    #allocation4 [shape = 's32[2]{0}', space=sflag, size = 0x8, scoped, tag = 'scoped memory for tpu_custom_call.1']
    #allocation5 [shape = 'u8[8192]{0}', space=vmem, size = 0x2000, scoped, tag = 'output window, operand 0']
    %12 = vsyncpa [#allocation3], 0
    %13 = vsyncpa [#allocation4], 0
    %s14 = scalar_lea.sflag [#allocation4], 1
    %15 = vsyncpa %s14, 0
    loop: start=0, step=1, limit=4
    $region2: #{tpu_custom_call.1} parent=1 // loop_pre_header
      _
    $region3: #{tpu_custom_call.1} parent=1 // loop_header
      %s17 = sphi 0, %s21
      %p18 = scmp.ge.s32.totalorder %s17, 4
      %s27 = sphi 0, %s29
      %s30 = sphi 0, %s27
      %s31 = sphi 0, %s30
      %s47 = sphi 0, %s31
      %s51 = sphi 0, %s51
      %s53 = sphi 0, %s51
      %s54 = sphi 0, %s53
      %s68 = sphi 0, %s54
      %s72 = sphi 0, %s72
      %s74 = sphi 0, %s72
      %s75 = sphi 0, %s74
      %s89 = sphi 0, %s75
      %s93 = sphi 0, %s93
      %s95 = sphi 0, %s93
      %s96 = sphi 0, %s95
      %s110 = sphi 0, %s96
      %s114 = sphi 0, %s114
      %s116 = sphi 0, %s114
      %s117 = sphi 0, %s116
      %s131 = sphi 0, %s117
      %s135 = sphi 0, %s135
      %s137 = sphi 0, %s135
      %s138 = sphi 0, %s137
      %s152 = sphi 0, %s138
      %s156 = sphi 0, %s156
      %s158 = sphi 0, %s156
      %s159 = sphi 0, %s158
      %s173 = sphi 0, %s159
      %s179 = sphi 0, %s181
      %s182 = sphi 0, %s179
      %s183 = sphi 0, %s182
      %s199 = sphi 0, %s183
    $region4: #{tpu_custom_call.1} parent=1 // loop_header_branch
      %20 = sbr.rel (%p18) target = $region8
    $region5: #{tpu_custom_call.1} parent=1 // loop_body
      %s22 = ssub.s32 %s17, 1
      %s23 = ssub.s32 %s17, 2
      %s24 = sadd.s32 %s17, 1
      %s25 = ssub.s32 %s17, %s24
      %p26 = scmp.eq.s32.totalorder %s25, 0
      %s28 = sadd.s32 %s27, 1
      %s29 = scalar_select %p26, %s27, %s28
      %p32 = pneg %p26
      %p33 = scmp.eq.s32.totalorder %s17, 1
      %p34 = por %p32, %p33
      %p35 = scmp.ne.s32.totalorder %s27, %s30
      %p36 = scmp.eq.s32.totalorder %s17, 0
      %p37 = por %p35, %p36
      %p38 = scmp.ne.s32.totalorder %s27, %s30
      %p39 = scmp.eq.s32.totalorder %s22, 1
      %p40 = por %p38, %p39
      %p41 = scmp.ne.s32.totalorder %s30, %s31
      %p42 = scmp.eq.s32.totalorder %s22, 0
      %p43 = por %p41, %p42
      %p44 = scmp.ne.s32.totalorder %s30, %s31
      %p45 = scmp.eq.s32.totalorder %s23, 1
      %p46 = por %p44, %p45
      %p48 = scmp.ne.s32.totalorder %s31, %s47
      %p49 = scmp.eq.s32.totalorder %s23, 0
      %p50 = por %p48, %p49
      %s52 = sadd.s32 %s51, 1
      %p55 = scmp.eq.s32.totalorder %s17, 1
      %p56 = scmp.ne.s32.totalorder %s51, %s53
      %p57 = scmp.eq.s32.totalorder %s17, 0
      %p58 = por %p56, %p57
      %p59 = scmp.ne.s32.totalorder %s51, %s53
      %p60 = scmp.eq.s32.totalorder %s22, 1
      %p61 = por %p59, %p60
      %p62 = scmp.ne.s32.totalorder %s53, %s54
      %p63 = scmp.eq.s32.totalorder %s22, 0
      %p64 = por %p62, %p63
      %p65 = scmp.ne.s32.totalorder %s53, %s54
      %p66 = scmp.eq.s32.totalorder %s23, 1
      %p67 = por %p65, %p66
      %p69 = scmp.ne.s32.totalorder %s54, %s68
      %p70 = scmp.eq.s32.totalorder %s23, 0
      %p71 = por %p69, %p70
      %s73 = sadd.s32 %s72, 1
      %p76 = scmp.eq.s32.totalorder %s17, 1
      %p77 = scmp.ne.s32.totalorder %s72, %s74
      %p78 = scmp.eq.s32.totalorder %s17, 0
      %p79 = por %p77, %p78
      %p80 = scmp.ne.s32.totalorder %s72, %s74
      %p81 = scmp.eq.s32.totalorder %s22, 1
      %p82 = por %p80, %p81
      %p83 = scmp.ne.s32.totalorder %s74, %s75
      %p84 = scmp.eq.s32.totalorder %s22, 0
      %p85 = por %p83, %p84
      %p86 = scmp.ne.s32.totalorder %s74, %s75
      %p87 = scmp.eq.s32.totalorder %s23, 1
      %p88 = por %p86, %p87
      %p90 = scmp.ne.s32.totalorder %s75, %s89
      %p91 = scmp.eq.s32.totalorder %s23, 0
      %p92 = por %p90, %p91
      %s94 = sadd.s32 %s93, 1
      %p97 = scmp.eq.s32.totalorder %s17, 1
      %p98 = scmp.ne.s32.totalorder %s93, %s95
      %p99 = scmp.eq.s32.totalorder %s17, 0
      %p100 = por %p98, %p99
      %p101 = scmp.ne.s32.totalorder %s93, %s95
      %p102 = scmp.eq.s32.totalorder %s22, 1
      %p103 = por %p101, %p102
      %p104 = scmp.ne.s32.totalorder %s95, %s96
      %p105 = scmp.eq.s32.totalorder %s22, 0
      %p106 = por %p104, %p105
      %p107 = scmp.ne.s32.totalorder %s95, %s96
      %p108 = scmp.eq.s32.totalorder %s23, 1
      %p109 = por %p107, %p108
      %p111 = scmp.ne.s32.totalorder %s96, %s110
      %p112 = scmp.eq.s32.totalorder %s23, 0
      %p113 = por %p111, %p112
      %s115 = sadd.s32 %s114, 1
      %p118 = scmp.eq.s32.totalorder %s17, 1
      %p119 = scmp.ne.s32.totalorder %s114, %s116
      %p120 = scmp.eq.s32.totalorder %s17, 0
      %p121 = por %p119, %p120
      %p122 = scmp.ne.s32.totalorder %s114, %s116
      %p123 = scmp.eq.s32.totalorder %s22, 1
      %p124 = por %p122, %p123
      %p125 = scmp.ne.s32.totalorder %s116, %s117
      %p126 = scmp.eq.s32.totalorder %s22, 0
      %p127 = por %p125, %p126
      %p128 = scmp.ne.s32.totalorder %s116, %s117
      %p129 = scmp.eq.s32.totalorder %s23, 1
      %p130 = por %p128, %p129
      %p132 = scmp.ne.s32.totalorder %s117, %s131
      %p133 = scmp.eq.s32.totalorder %s23, 0
      %p134 = por %p132, %p133
      %s136 = sadd.s32 %s135, 1
      %p139 = scmp.eq.s32.totalorder %s17, 1
      %p140 = scmp.ne.s32.totalorder %s135, %s137
      %p141 = scmp.eq.s32.totalorder %s17, 0
      %p142 = por %p140, %p141
      %p143 = scmp.ne.s32.totalorder %s135, %s137
      %p144 = scmp.eq.s32.totalorder %s22, 1
      %p145 = por %p143, %p144
      %p146 = scmp.ne.s32.totalorder %s137, %s138
      %p147 = scmp.eq.s32.totalorder %s22, 0
      %p148 = por %p146, %p147
      %p149 = scmp.ne.s32.totalorder %s137, %s138
      %p150 = scmp.eq.s32.totalorder %s23, 1
      %p151 = por %p149, %p150
      %p153 = scmp.ne.s32.totalorder %s138, %s152
      %p154 = scmp.eq.s32.totalorder %s23, 0
      %p155 = por %p153, %p154
      %s157 = sadd.s32 %s156, 1
      %p160 = scmp.eq.s32.totalorder %s17, 1
      %p161 = scmp.ne.s32.totalorder %s156, %s158
      %p162 = scmp.eq.s32.totalorder %s17, 0
      %p163 = por %p161, %p162
      %p164 = scmp.ne.s32.totalorder %s156, %s158
      %p165 = scmp.eq.s32.totalorder %s22, 1
      %p166 = por %p164, %p165
      %p167 = scmp.ne.s32.totalorder %s158, %s159
      %p168 = scmp.eq.s32.totalorder %s22, 0
      %p169 = por %p167, %p168
      %p170 = scmp.ne.s32.totalorder %s158, %s159
      %p171 = scmp.eq.s32.totalorder %s23, 1
      %p172 = por %p170, %p171
      %p174 = scmp.ne.s32.totalorder %s159, %s173
      %p175 = scmp.eq.s32.totalorder %s23, 0
      %p176 = por %p174, %p175
      %s177 = ssub.s32 %s17, %s24
      %p178 = scmp.eq.s32.totalorder %s177, 0
      %s180 = sadd.s32 %s179, 1
      %s181 = scalar_select %p178, %s179, %s180
      %p184 = pneg %p178
      %p185 = scmp.eq.s32.totalorder %s17, 1
      %p186 = por %p184, %p185
      %p187 = scmp.ne.s32.totalorder %s179, %s182
      %p188 = scmp.eq.s32.totalorder %s17, 0
      %p189 = por %p187, %p188
      %p190 = scmp.ne.s32.totalorder %s179, %s182
      %p191 = scmp.eq.s32.totalorder %s22, 1
      %p192 = por %p190, %p191
      %p193 = scmp.ne.s32.totalorder %s182, %s183
      %p194 = scmp.eq.s32.totalorder %s22, 0
      %p195 = por %p193, %p194
      %p196 = scmp.ne.s32.totalorder %s182, %s183
      %p197 = scmp.eq.s32.totalorder %s23, 1
      %p198 = por %p196, %p197
      %p200 = scmp.ne.s32.totalorder %s183, %s199
      %p201 = scmp.eq.s32.totalorder %s23, 0
      %p202 = por %p200, %p201
      %p203 = scmp.le.s32.totalorder 1, %s17
      %p204 = scmp.lt.s32.totalorder %s17, 3
      %p205 = pnand %p203, %p204
      %p206 = pneg %p205
      // Predicated region
      $region9: #{tpu_custom_call.1} parent=5 // pred_check
        _
      $region10: #{tpu_custom_call.1} parent=5 // pred_check_branch
        %208 = sbr.rel (%p205) target = $region12
      $region11: #{tpu_custom_call.1} parent=5 // pred_region
        %s209 = ssub.s32 %s17, 1
        // Predicated region
        $region13: #{tpu_custom_call.1} parent=11 // pred_check
          %p210 = pneg %p64
        $region14: #{tpu_custom_call.1} parent=11 // pred_check_branch
          %212 = sbr.rel (%p210) target = $region16
        $region15: #{tpu_custom_call.1} parent=11 // pred_region
          _
        $region16: #{tpu_custom_call.1} parent=11 // pred_fallthru
          _
        // Predicated region
        $region17: #{tpu_custom_call.1} parent=11 // pred_check
          %p213 = pneg %p85
        $region18: #{tpu_custom_call.1} parent=11 // pred_check_branch
          %215 = sbr.rel (%p213) target = $region20
        $region19: #{tpu_custom_call.1} parent=11 // pred_region
          _
        $region20: #{tpu_custom_call.1} parent=11 // pred_fallthru
          _
        // Predicated region
        $region21: #{tpu_custom_call.1} parent=11 // pred_check
          %p216 = pneg %p106
        $region22: #{tpu_custom_call.1} parent=11 // pred_check_branch
          %218 = sbr.rel (%p216) target = $region24
        $region23: #{tpu_custom_call.1} parent=11 // pred_region
          %220 = vsyncadd [#allocation3], 0
          %s221 = sshll.u32 %s3, 4
          %s222 = int_to_ptr.hbm [resolvable:$true] %s221
          %s223 = sshll.u32 [#allocation2], 4
          %s224 = int_to_ptr.vmem [resolvable:$true] %s223
          %229 = dma.hbm_to_vmem [thread:$0]  %s222, 256, %s224, [#allocation3], 64, 64, 4
        $region24: #{tpu_custom_call.1} parent=11 // pred_fallthru
          _
        // Predicated region
        $region25: #{tpu_custom_call.1} parent=11 // pred_check
          %p230 = pneg %p127
        $region26: #{tpu_custom_call.1} parent=11 // pred_check_branch
          %232 = sbr.rel (%p230) target = $region28
        $region27: #{tpu_custom_call.1} parent=11 // pred_region
          _
        $region28: #{tpu_custom_call.1} parent=11 // pred_fallthru
          _
        // Predicated region
        $region29: #{tpu_custom_call.1} parent=11 // pred_check
          %p233 = pneg %p148
        $region30: #{tpu_custom_call.1} parent=11 // pred_check_branch
          %235 = sbr.rel (%p233) target = $region32
        $region31: #{tpu_custom_call.1} parent=11 // pred_region
          _
        $region32: #{tpu_custom_call.1} parent=11 // pred_fallthru
          _
        // Predicated region
        $region33: #{tpu_custom_call.1} parent=11 // pred_check
          %p236 = pneg %p169
        $region34: #{tpu_custom_call.1} parent=11 // pred_check_branch
          %238 = sbr.rel (%p236) target = $region36
        $region35: #{tpu_custom_call.1} parent=11 // pred_region
          _
        $region36: #{tpu_custom_call.1} parent=11 // pred_fallthru
          _
      $region12: #{tpu_custom_call.1} parent=5 // pred_fallthru
        _
      %p239 = scmp.lt.s32.totalorder %s17, 2
      // Predicated region
      $region37: #{tpu_custom_call.1} parent=5 // pred_check
        %p240 = pneg %p239
      $region38: #{tpu_custom_call.1} parent=5 // pred_check_branch
        %242 = sbr.rel (%p240) target = $region40
      $region39: #{tpu_custom_call.1} parent=5 // pred_region
        // Predicated region
        $region41: #{tpu_custom_call.1} parent=39 // pred_check
          %p243 = pneg %p37
        $region42: #{tpu_custom_call.1} parent=39 // pred_check_branch
          %245 = sbr.rel (%p243) target = $region44
        $region43: #{tpu_custom_call.1} parent=39 // pred_region
          %p246 = scmp.lt.s32.totalorder %s17, 1
          %s247 = scalar_select %p246, %s17, 1
          %s248 = smul.addr %s247, 8
          %s249 = scalar_lea.vmem %s0, %s248
        $region44: #{tpu_custom_call.1} parent=39 // pred_fallthru
          _
      $region40: #{tpu_custom_call.1} parent=5 // pred_fallthru
        _
      %p250 = scmp.le.s32.totalorder 1, %s17
      %p251 = scmp.lt.s32.totalorder %s17, 3
      %p252 = pnand %p250, %p251
      %p253 = pneg %p252
      // Predicated region
      $region45: #{tpu_custom_call.1} parent=5 // pred_check
        _
      $region46: #{tpu_custom_call.1} parent=5 // pred_check_branch
        %255 = sbr.rel (%p252) target = $region48
      $region47: #{tpu_custom_call.1} parent=5 // pred_region
        %s256 = ssub.s32 %s17, 1
        // Predicated region
        $region49: #{tpu_custom_call.1} parent=47 // pred_check
          %p257 = pneg %p106
        $region50: #{tpu_custom_call.1} parent=47 // pred_check_branch
          %259 = sbr.rel (%p257) target = $region52
        $region51: #{tpu_custom_call.1} parent=47 // pred_region
          %261 = dma.done [#allocation3], 256
        $region52: #{tpu_custom_call.1} parent=47 // pred_fallthru
          _
        %p262 = scmp.lt.s32.totalorder %s22, 1
        %s263 = scalar_select %p262, %s22, 1
        %s264 = smul.addr %s263, 8
        %s265 = scalar_lea.vmem %s0, %s264
        %p266 = pneg %p43
        %p267 = pneg %p40
        %p268 = pneg %p64
        %p269 = pneg %p61
        %p270 = pneg %p85
        %p271 = pneg %p82
        %p272 = pneg %p106
        %p273 = pneg %p103
        %p274 = pneg %p127
        %p275 = pneg %p124
        %p276 = pneg %p148
        %p277 = pneg %p145
        %p278 = pneg %p169
        %p279 = pneg %p166
        %p280 = pneg %p195
        %p281 = pneg %p192
        %s282 = sand.u32 %s182, 1
        %s283 = scalar_lea.sflag [#allocation4], %s282
        %s284 = sand.u32 %s182, 1
        %s285 = smul.addr %s284, 8
        %s286 = scalar_lea.vmem [#allocation5], %s285
        %p287 = scmp.lt.s32.totalorder %s22, 1
        %s288 = scalar_select %p287, %s22, 1
        %s289 = smul.addr %s288, 8
        %s290 = scalar_lea.vmem %s0, %s289
        %v292 = vld [vmem:[%s290] sm:$0xff]
        %v293 = vpack.c.bf16 %v292, %v292
        %v294 = vld [vmem:[%s1] sm:$0xf]
        %v295 = vld [vmem:[%s1 + $0x4] sm:$0xf]
        %v296 = vld [vmem:[%s2] sm:$0x1]
        %v298 = vperm.slane %v296, 0
        %v302 = vunpack.c.l.b16 %v294
        %v303 = vunpack.c.l.b16 %v295
        %v304 = vpack.c.b16 %v303, %v302
        %vm306 = vcmask 130048
        %v308 = vsel %vm306, %v293, 0
        %310 = vmatpush.bf16.msra.mxu0 0
        %311 = vmatpush.bf16.msra.mxu0 0
        %312 = vmatpush.bf16.msra.mxu0 0
        %313 = vmatpush.bf16.msra.mxu0 0
        %314 = vmatpush.bf16.msra.mxu0 0
        %315 = vmatpush.bf16.msra.mxu0 0
        %316 = vmatpush.bf16.msra.mxu0 0
        %317 = vmatpush.bf16.msra.mxu0 %v304
        %318 = vmatmul.bf16.gmra.mxu0 %v308
        %v319 = vpop.f32.mrf.mxu0
        %v320 = vadd.f32 %v298, %v319
        %v321 = vpop.f32.mrf.mxu0
        %322 = vdwg.mxu0
        %v323 = vmax.f32 %v320, 0.0
        %v324 = vpack.c.bf16 %v323, %v323
        %v325 = vld [vmem:[#allocation2] sm:$0xf]
        %v326 = vld [vmem:[#allocation2 + $0x4] sm:$0xf]
        %v327 = vld [vmem:[#allocation2 + $0x8] sm:$0xf]
        %v328 = vld [vmem:[#allocation2 + $0xc] sm:$0xf]
        %v329 = vld [vmem:[%s4] sm:$0x1]
        %v331 = vperm.slane %v329, 0
        %v337 = vunpack.c.l.b16 %v325
        %v338 = vunpack.c.l.b16 %v326
        %v339 = vunpack.c.l.b16 %v327
        %v340 = vunpack.c.l.b16 %v328
        %v341 = vpack.c.b16 %v338, %v337
        %v342 = vpack.c.b16 %v340, %v339
        %vm345 = vcmask 261120
        %v347 = vsel %vm345, %v324, 0
        %349 = vmatpush.bf16.msra.mxu0 0
        %350 = vmatpush.bf16.msra.mxu0 0
        %351 = vmatpush.bf16.msra.mxu0 0
        %352 = vmatpush.bf16.msra.mxu0 0
        %353 = vmatpush.bf16.msra.mxu0 0
        %354 = vmatpush.bf16.msra.mxu0 0
        %355 = vmatpush.bf16.msra.mxu0 %v342
        %356 = vmatpush.bf16.msra.mxu0 %v341
        %357 = vmatmul.bf16.gmra.mxu0 %v347
        %v358 = vpop.f32.mrf.mxu0
        %v359 = vadd.f32 %v331, %v358
        %v360 = vpop.f32.mrf.mxu0
        %361 = vdwg.mxu0
        %v362 = vmax.f32 %v359, 0.0
        %v363 = vpack.c.bf16 %v362, %v362
        %v364 = vld [vmem:[%s5] sm:$0xf]
        %v365 = vld [vmem:[%s5 + $0x4] sm:$0xf]
        %v366 = vld [vmem:[%s5 + $0x8] sm:$0xf]
        %v367 = vld [vmem:[%s5 + $0xc] sm:$0xf]
        %v368 = vld [vmem:[%s6] sm:$0x1]
        %v370 = vperm.slane %v368, 0
        %v376 = vunpack.c.l.b16 %v364
        %v377 = vunpack.c.l.b16 %v365
        %v378 = vunpack.c.l.b16 %v366
        %v379 = vunpack.c.l.b16 %v367
        %v380 = vpack.c.b16 %v377, %v376
        %v381 = vpack.c.b16 %v379, %v378
        %v385 = vsel %vm345, %v363, 0
        %387 = vmatpush.bf16.msra.mxu0 0
        %388 = vmatpush.bf16.msra.mxu0 0
        %389 = vmatpush.bf16.msra.mxu0 0
        %390 = vmatpush.bf16.msra.mxu0 0
        %391 = vmatpush.bf16.msra.mxu0 0
        %392 = vmatpush.bf16.msra.mxu0 0
        %393 = vmatpush.bf16.msra.mxu0 %v381
        %394 = vmatpush.bf16.msra.mxu0 %v380
        %395 = vmatmul.bf16.gmra.mxu0 %v385
        %v396 = vpop.f32.mrf.mxu0
        %v397 = vadd.f32 %v370, %v396
        %v398 = vpop.f32.mrf.mxu0
        %399 = vdwg.mxu0
        %400 = vst.msk [vmem:[%s286] sm:$0xff] %vm306, %v397
        %s401 = sand.u32 %s182, 1
        %s402 = scalar_lea.sflag [#allocation4], %s401
        %s403 = sand.u32 %s182, 1
        %s404 = smul.addr %s403, 8
        %s405 = scalar_lea.vmem [#allocation5], %s404
        // Predicated region
        $region53: #{tpu_custom_call.1} parent=47 // pred_check
          %p406 = pneg %p192
        $region54: #{tpu_custom_call.1} parent=47 // pred_check_branch
          %408 = sbr.rel (%p406) target = $region56
        $region55: #{tpu_custom_call.1} parent=47 // pred_region
          %410 = vsyncadd %s402, 0
          %s411 = smul.addr %s22, 8
          %s412 = scalar_lea.hbm %s7, %s411
          %s414 = sshll.u32 %s405, 4
          %s415 = int_to_ptr.vmem [resolvable:$true] %s414
          %s416 = sshll.u32 %s412, 4
          %s417 = int_to_ptr.hbm [resolvable:$true] %s416
          %419 = dma.vmem_to_hbm [thread:$0]  %s415, 128, %s417, %s402
        $region56: #{tpu_custom_call.1} parent=47 // pred_fallthru
          _
      $region48: #{tpu_custom_call.1} parent=5 // pred_fallthru
        _
      %p420 = scmp.le.s32.totalorder 2, %s17
      // Predicated region
      $region57: #{tpu_custom_call.1} parent=5 // pred_check
        %p421 = pneg %p420
      $region58: #{tpu_custom_call.1} parent=5 // pred_check_branch
        %423 = sbr.rel (%p421) target = $region60
      $region59: #{tpu_custom_call.1} parent=5 // pred_region
        %s424 = ssub.s32 %s17, 2
        // Predicated region
        $region61: #{tpu_custom_call.1} parent=59 // pred_check
          %p425 = pneg %p198
        $region62: #{tpu_custom_call.1} parent=59 // pred_check_branch
          %427 = sbr.rel (%p425) target = $region64
        $region63: #{tpu_custom_call.1} parent=59 // pred_region
          %s428 = sand.u32 %s183, 1
          %s429 = scalar_lea.sflag [#allocation4], %s428
          %s430 = sand.u32 %s183, 1
          %s431 = smul.addr %s430, 8
          %s432 = scalar_lea.vmem [#allocation5], %s431
          %434 = dma.done %s429, 128
        $region64: #{tpu_custom_call.1} parent=59 // pred_fallthru
          _
      $region60: #{tpu_custom_call.1} parent=5 // pred_fallthru
        _
    $region6: #{tpu_custom_call.1} parent=1 // loop_footer
      %s21 = sadd.s32 1, %s17
    $region7: #{tpu_custom_call.1} parent=1 // loop_footer_branch
      %16 = sbr.rel target = $region3
    $region8: #{tpu_custom_call.1} parent=1 // loop_exit
      _
    %435 = vsyncpa [#allocation3], 1
    %s436 = scalar_lea.sflag [#allocation3], 1
    %437 = vsyncpa %s436, 1
    %438 = vsyncpa [#allocation4], 1
    %s439 = scalar_lea.sflag [#allocation4], 1
    %440 = vsyncpa %s439, 1

</llo_original>
